<compile_context>
chip_gen: v7x
topology: tpu7x:2x2x1
jax: 0.10.0
libtpu: 0.0.40
codegen_flags: <defaults>
</compile_context>

<pallas_src>
from functools import partial

import jax
import jax.numpy as jnp
from jax.experimental import pallas as pl
from jax.experimental.pallas import tpu as pltpu

BN_EPS = 1e-5


def round_up(x, m):
    return (x + m - 1) // m * m


def mlp_kernel(x_ref, w1_ref, w2_ref, w3_ref, w4_ref, w5_ref, b_ref, out_ref,
               *, b_offsets, b_widths):
    """Fused 5-layer MLP: (Linear -> ReLU)x4 -> Linear, BN pre-folded into weights.

    All operands live in VMEM. Matmuls run bf16 x bf16 -> f32 on the MXU;
    bias add + ReLU are f32 VPU ops. Output store is lane-dense (width % 128 == 0).
    """
    h = x_ref[...]  # bf16 [tile_b, P_in], consumed directly by the MXU
    w_refs = (w1_ref, w2_ref, w3_ref, w4_ref, w5_ref)
    for li in range(5):  # static unroll (tiny, fixed trip count)
        off, width = b_offsets[li], b_widths[li]
        acc = jnp.dot(h, w_refs[li][...], preferred_element_type=jnp.float32)
        acc = acc + b_ref[:, off:off + width]          # f32 bias (static slice)
        if li < 4:
            h = jnp.maximum(acc, 0.0).astype(jnp.bfloat16)  # ReLU, back to bf16 for MXU
        else:
            out_ref[...] = acc.astype(out_ref.dtype)        # lane-dense f32 store


def init_params(key, n_feature, n_hidden, n_output):
    """Parameter init mirroring PyTorch Linear defaults; non-trivial BN stats so
    the BN folding path is genuinely exercised."""
    dims = [n_feature, n_hidden, n_hidden // 2, n_hidden // 4, n_hidden // 8, n_output]
    params = []
    for li in range(5):
        fan_in, fan_out = dims[li], dims[li + 1]
        key, kw, kb, k1, k2, k3, k4 = jax.random.split(key, 7)
        bound = 1.0 / jnp.sqrt(jnp.float32(fan_in))
        # Stored as [in, out] (transpose of PyTorch's [out, in]).
        w = jax.random.uniform(kw, (fan_in, fan_out), jnp.float32, -bound, bound)
        b = jax.random.uniform(kb, (1, fan_out), jnp.float32, -bound, bound)
        layer = {"w": w, "b": b}
        if li < 4:  # BN only on the 4 hidden layers
            layer["gamma"] = jax.random.uniform(k1, (1, fan_out), jnp.float32, 0.8, 1.2)
            layer["beta"] = 0.1 * jax.random.normal(k2, (1, fan_out), jnp.float32)
            layer["mean"] = 0.1 * jax.random.normal(k3, (1, fan_out), jnp.float32)
            layer["var"] = jax.random.uniform(k4, (1, fan_out), jnp.float32, 0.5, 1.5)
        params.append(layer)
    return params


def fold_and_pad(params):
    """Fold eval-mode BN_i into Linear_{i+1}; zero-pad every dim to a multiple of
    128; cast weights to bf16; concatenate biases (f32) into one lane-dense row."""
    # --- BN folding (exact up to f32 reassociation) ---
    w = [params[0]["w"]]
    b = [params[0]["b"]]
    for li in range(4):
        p = params[li]
        s = p["gamma"] * jax.lax.rsqrt(p["var"] + BN_EPS)   # (1, d_i)
        t = p["beta"] - p["mean"] * s                       # (1, d_i)
        w_next = params[li + 1]["w"]                        # (d_i, d_{i+1})
        b_next = params[li + 1]["b"]                        # (1, d_{i+1})
        w.append(s.reshape(-1, 1) * w_next)
        b.append(t @ w_next + b_next)

    dims = [w[0].shape[0]] + [wi.shape[1] for wi in w]      # [F, h1..h4, out]
    dims_pad = [round_up(d, 128) for d in dims]

    # --- zero-pad to lane-dense shapes ---
    w_pad, b_pad = [], []
    for li in range(5):
        wi = jnp.zeros((dims_pad[li], dims_pad[li + 1]), jnp.float32)
        wi = wi.at[: dims[li], : dims[li + 1]].set(w[li])
        bi = jnp.zeros((1, dims_pad[li + 1]), jnp.float32)
        bi = bi.at[:, : dims[li + 1]].set(b[li])
        w_pad.append(wi.astype(jnp.bfloat16))               # bf16 MXU operands
        b_pad.append(bi)                                     # bias stays f32
    b_concat = jnp.concatenate(b_pad, axis=1)               # (1, sum(P_out))
    return w_pad, b_concat, dims_pad


def mlp_forward(x, params, n_output, *, tile_b=256):
    B = x.shape[0]
    w_pad, b_concat, dims_pad = fold_and_pad(params)
    n_feature = params[0]["w"].shape[0]

    # Glue: flatten NCHW -> [B, F] (matches X.view(X.shape[0], -1)), zero-pad
    # features to a lane multiple, pad batch to the tile, cast to bf16.
    x_flat = x.reshape(B, -1).astype(jnp.float32)
    assert x_flat.shape[1] == n_feature

    tile_b = min(tile_b, round_up(B, 8))
    b_padded = round_up(B, tile_b)
    x_pad = jnp.zeros((b_padded, dims_pad[0]), jnp.float32)
    x_pad = x_pad.at[:B, :n_feature].set(x_flat).astype(jnp.bfloat16)

    # Static bias offsets inside the concatenated bias row.
    b_widths = tuple(dims_pad[1:])
    b_offsets, off = [], 0
    for wdt in b_widths:
        b_offsets.append(off)
        off += wdt
    total_b = off

    flops = 2 * b_padded * sum(dims_pad[i] * dims_pad[i + 1] for i in range(5))
    bytes_accessed = (x_pad.size * 2 + sum(wi.size for wi in w_pad) * 2
                      + b_concat.size * 4 + b_padded * dims_pad[5] * 4)

    kernel = partial(mlp_kernel, b_offsets=tuple(b_offsets), b_widths=b_widths)
    grid = (b_padded // tile_b,)

    out_pad = pl.pallas_call(
        kernel,
        out_shape=jax.ShapeDtypeStruct((b_padded, dims_pad[5]), jnp.float32),
        grid=grid,
        in_specs=[
            pl.BlockSpec((tile_b, dims_pad[0]), lambda i: (i, 0)),      # x tile
            *[pl.BlockSpec((dims_pad[li], dims_pad[li + 1]), lambda i: (0, 0))
              for li in range(5)],                                       # weights (resident)
            pl.BlockSpec((1, total_b), lambda i: (0, 0)),                # packed biases
        ],
        out_specs=pl.BlockSpec((tile_b, dims_pad[5]), lambda i: (i, 0)),
        compiler_params=pltpu.CompilerParams(
            dimension_semantics=("parallel",)),                          # v7x: 2 TCs
        cost_estimate=pl.CostEstimate(
            flops=flops, transcendentals=0, bytes_accessed=bytes_accessed),
    )(x_pad, *w_pad, b_concat)

    return out_pad[:B, :n_output]


if __name__ == "__main__":
    # Small shapes consistent with the module's forward:
    #   X: [B, C, H, W] = [8, 4, 4, 4]  ->  n_feature = 64
    B, C, H, W = 8, 4, 4, 4
    n_feature = C * H * W       # 64
    n_hidden = 64               # hidden dims: 64 -> 32 -> 16 -> 8
    n_output = 10

    key = jax.random.PRNGKey(0)
    key, kx = jax.random.split(key)
    x = jax.random.normal(kx, (B, C, H, W), jnp.float32)

    params = init_params(key, n_feature, n_hidden, n_output)

    y = mlp_forward(x, params, n_output)
    jax.block_until_ready(y)

    # Pure-JAX f32 reference with the ORIGINAL (unfolded) eval-mode semantics.
    def ref_forward(x, params):
        h = x.reshape(x.shape[0], -1)
        for li in range(4):
            p = params[li]
            h = jnp.maximum(h @ p["w"] + p["b"], 0.0)
            h = (h - p["mean"]) * jax.lax.rsqrt(p["var"] + BN_EPS) * p["gamma"] + p["beta"]
        return h @ params[4]["w"] + params[4]["b"]

    y_ref = ref_forward(x, params)
    assert y.shape == (B, n_output), y.shape
    # Kernel uses bf16 weights/activations on the MXU -> bf16-level tolerance
    # against the f32 reference.
    max_err = float(jnp.max(jnp.abs(y - y_ref)))
    assert jnp.allclose(y, y_ref, atol=2e-2, rtol=2e-2), f"mismatch vs reference: {max_err}"

    print("KERNEL_OK")
</pallas_src>

<mosaic_0001>
module attributes {stable_mosaic.version = 11 : i64} {
  func.func @mlp_kernel(%arg0: i32, %arg1: memref<8x128xbf16, #tpu.memory_space<vmem>>, %arg2: memref<128x128xbf16, #tpu.memory_space<vmem>>, %arg3: memref<128x128xbf16, #tpu.memory_space<vmem>>, %arg4: memref<128x128xbf16, #tpu.memory_space<vmem>>, %arg5: memref<128x128xbf16, #tpu.memory_space<vmem>>, %arg6: memref<128x128xbf16, #tpu.memory_space<vmem>>, %arg7: memref<1x640xf32, #tpu.memory_space<vmem>>, %arg8: memref<8x128xf32, #tpu.memory_space<vmem>>) attributes {dimension_semantics = [#tpu.dimension_semantics<parallel>], iteration_bounds = array<i64: 1>, scalar_prefetch = 0 : i64, scratch_operands = 0 : i64, tpu.core_type = #tpu.core_type<tc>, window_params = [{transform_indices = @transform_0, window_bounds = array<i64: 8, 128>}, {pipeline_mode = #tpu.pipeline_mode<synchronous>, transform_indices = @transform_1, window_bounds = array<i64: 128, 128>}, {pipeline_mode = #tpu.pipeline_mode<synchronous>, transform_indices = @transform_2, window_bounds = array<i64: 128, 128>}, {pipeline_mode = #tpu.pipeline_mode<synchronous>, transform_indices = @transform_3, window_bounds = array<i64: 128, 128>}, {pipeline_mode = #tpu.pipeline_mode<synchronous>, transform_indices = @transform_4, window_bounds = array<i64: 128, 128>}, {pipeline_mode = #tpu.pipeline_mode<synchronous>, transform_indices = @transform_5, window_bounds = array<i64: 128, 128>}, {pipeline_mode = #tpu.pipeline_mode<synchronous>, transform_indices = @transform_6, window_bounds = array<i64: 1, 640>}, {transform_indices = @transform_7, window_bounds = array<i64: 8, 128>}]} {
    %c0 = arith.constant 0 : index
    %c0_0 = arith.constant 0 : index
    %0 = vector.load %arg1[%c0, %c0_0] : memref<8x128xbf16, #tpu.memory_space<vmem>>, vector<8x128xbf16>
    %c0_1 = arith.constant 0 : index
    %c0_2 = arith.constant 0 : index
    %1 = vector.load %arg2[%c0_1, %c0_2] : memref<128x128xbf16, #tpu.memory_space<vmem>>, vector<128x128xbf16>
    %cst = arith.constant dense<0.000000e+00> : vector<8x128xf32>
    %2 = tpu.matmul %0, %1, %cst {dimension_numbers = #tpu.dot_dimension_numbers<[1], [0], [0], [1], [0, 0, 1, 1], [], []>} : vector<8x128xbf16>, vector<128x128xbf16>, vector<8x128xf32> -> vector<8x128xf32>
    %c0_3 = arith.constant 0 : index
    %c0_4 = arith.constant 0 : index
    %3 = vector.load %arg7[%c0_3, %c0_4] : memref<1x640xf32, #tpu.memory_space<vmem>>, vector<1x128xf32>
    %4 = vector.broadcast %3 : vector<1x128xf32> to vector<8x128xf32>
    %5 = arith.addf %2, %4 : vector<8x128xf32>
    %cst_5 = arith.constant 0.000000e+00 : f32
    %6 = vector.broadcast %cst_5 : f32 to vector<8x128xf32>
    %7 = arith.maximumf %5, %6 : vector<8x128xf32>
    %8 = arith.truncf %7 : vector<8x128xf32> to vector<8x128xbf16>
    %c0_6 = arith.constant 0 : index
    %c0_7 = arith.constant 0 : index
    %9 = vector.load %arg3[%c0_6, %c0_7] : memref<128x128xbf16, #tpu.memory_space<vmem>>, vector<128x128xbf16>
    %cst_8 = arith.constant dense<0.000000e+00> : vector<8x128xf32>
    %10 = tpu.matmul %8, %9, %cst_8 {dimension_numbers = #tpu.dot_dimension_numbers<[1], [0], [0], [1], [0, 0, 1, 1], [], []>} : vector<8x128xbf16>, vector<128x128xbf16>, vector<8x128xf32> -> vector<8x128xf32>
    %c0_9 = arith.constant 0 : index
    %c128 = arith.constant 128 : index
    %11 = vector.load %arg7[%c0_9, %c128] : memref<1x640xf32, #tpu.memory_space<vmem>>, vector<1x128xf32>
    %12 = vector.broadcast %11 : vector<1x128xf32> to vector<8x128xf32>
    %13 = arith.addf %10, %12 : vector<8x128xf32>
    %cst_10 = arith.constant 0.000000e+00 : f32
    %14 = vector.broadcast %cst_10 : f32 to vector<8x128xf32>
    %15 = arith.maximumf %13, %14 : vector<8x128xf32>
    %16 = arith.truncf %15 : vector<8x128xf32> to vector<8x128xbf16>
    %c0_11 = arith.constant 0 : index
    %c0_12 = arith.constant 0 : index
    %17 = vector.load %arg4[%c0_11, %c0_12] : memref<128x128xbf16, #tpu.memory_space<vmem>>, vector<128x128xbf16>
    %cst_13 = arith.constant dense<0.000000e+00> : vector<8x128xf32>
    %18 = tpu.matmul %16, %17, %cst_13 {dimension_numbers = #tpu.dot_dimension_numbers<[1], [0], [0], [1], [0, 0, 1, 1], [], []>} : vector<8x128xbf16>, vector<128x128xbf16>, vector<8x128xf32> -> vector<8x128xf32>
    %c0_14 = arith.constant 0 : index
    %c256 = arith.constant 256 : index
    %19 = vector.load %arg7[%c0_14, %c256] : memref<1x640xf32, #tpu.memory_space<vmem>>, vector<1x128xf32>
    %20 = vector.broadcast %19 : vector<1x128xf32> to vector<8x128xf32>
    %21 = arith.addf %18, %20 : vector<8x128xf32>
    %cst_15 = arith.constant 0.000000e+00 : f32
    %22 = vector.broadcast %cst_15 : f32 to vector<8x128xf32>
    %23 = arith.maximumf %21, %22 : vector<8x128xf32>
    %24 = arith.truncf %23 : vector<8x128xf32> to vector<8x128xbf16>
    %c0_16 = arith.constant 0 : index
    %c0_17 = arith.constant 0 : index
    %25 = vector.load %arg5[%c0_16, %c0_17] : memref<128x128xbf16, #tpu.memory_space<vmem>>, vector<128x128xbf16>
    %cst_18 = arith.constant dense<0.000000e+00> : vector<8x128xf32>
    %26 = tpu.matmul %24, %25, %cst_18 {dimension_numbers = #tpu.dot_dimension_numbers<[1], [0], [0], [1], [0, 0, 1, 1], [], []>} : vector<8x128xbf16>, vector<128x128xbf16>, vector<8x128xf32> -> vector<8x128xf32>
    %c0_19 = arith.constant 0 : index
    %c384 = arith.constant 384 : index
    %27 = vector.load %arg7[%c0_19, %c384] : memref<1x640xf32, #tpu.memory_space<vmem>>, vector<1x128xf32>
    %28 = vector.broadcast %27 : vector<1x128xf32> to vector<8x128xf32>
    %29 = arith.addf %26, %28 : vector<8x128xf32>
    %cst_20 = arith.constant 0.000000e+00 : f32
    %30 = vector.broadcast %cst_20 : f32 to vector<8x128xf32>
    %31 = arith.maximumf %29, %30 : vector<8x128xf32>
    %32 = arith.truncf %31 : vector<8x128xf32> to vector<8x128xbf16>
    %c0_21 = arith.constant 0 : index
    %c0_22 = arith.constant 0 : index
    %33 = vector.load %arg6[%c0_21, %c0_22] : memref<128x128xbf16, #tpu.memory_space<vmem>>, vector<128x128xbf16>
    %cst_23 = arith.constant dense<0.000000e+00> : vector<8x128xf32>
    %34 = tpu.matmul %32, %33, %cst_23 {dimension_numbers = #tpu.dot_dimension_numbers<[1], [0], [0], [1], [0, 0, 1, 1], [], []>} : vector<8x128xbf16>, vector<128x128xbf16>, vector<8x128xf32> -> vector<8x128xf32>
    %c0_24 = arith.constant 0 : index
    %c512 = arith.constant 512 : index
    %35 = vector.load %arg7[%c0_24, %c512] : memref<1x640xf32, #tpu.memory_space<vmem>>, vector<1x128xf32>
    %36 = vector.broadcast %35 : vector<1x128xf32> to vector<8x128xf32>
    %37 = arith.addf %34, %36 : vector<8x128xf32>
    %c0_25 = arith.constant 0 : index
    %c0_26 = arith.constant 0 : index
    %38 = vector.load %arg8[%c0_25, %c0_26] : memref<8x128xf32, #tpu.memory_space<vmem>>, vector<8x128xf32>
    tpu.vector_store %arg8[%c0_25, %c0_26], %37 {strides = array<i32>} : memref<8x128xf32, #tpu.memory_space<vmem>>, vector<8x128xf32>,
    return
  }
  func.func @transform_0(%arg0: i32) -> (i32, i32) {
    %c0_i32 = arith.constant 0 : i32
    %c0_i32_0 = arith.constant 0 : i32
    return %arg0, %c0_i32 : i32, i32
  }
  func.func @transform_1(%arg0: i32) -> (i32, i32) {
    %c0_i32 = arith.constant 0 : i32
    %c0_i32_0 = arith.constant 0 : i32
    %c0_i32_1 = arith.constant 0 : i32
    return %c0_i32, %c0_i32_0 : i32, i32
  }
  func.func @transform_2(%arg0: i32) -> (i32, i32) {
    %c0_i32 = arith.constant 0 : i32
    %c0_i32_0 = arith.constant 0 : i32
    %c0_i32_1 = arith.constant 0 : i32
    return %c0_i32, %c0_i32_0 : i32, i32
  }
  func.func @transform_3(%arg0: i32) -> (i32, i32) {
    %c0_i32 = arith.constant 0 : i32
    %c0_i32_0 = arith.constant 0 : i32
    %c0_i32_1 = arith.constant 0 : i32
    return %c0_i32, %c0_i32_0 : i32, i32
  }
  func.func @transform_4(%arg0: i32) -> (i32, i32) {
    %c0_i32 = arith.constant 0 : i32
    %c0_i32_0 = arith.constant 0 : i32
    %c0_i32_1 = arith.constant 0 : i32
    return %c0_i32, %c0_i32_0 : i32, i32
  }
  func.func @transform_5(%arg0: i32) -> (i32, i32) {
    %c0_i32 = arith.constant 0 : i32
    %c0_i32_0 = arith.constant 0 : i32
    %c0_i32_1 = arith.constant 0 : i32
    return %c0_i32, %c0_i32_0 : i32, i32
  }
  func.func @transform_6(%arg0: i32) -> (i32, i32) {
    %c0_i32 = arith.constant 0 : i32
    %c0_i32_0 = arith.constant 0 : i32
    %c0_i32_1 = arith.constant 0 : i32
    return %c0_i32, %c0_i32_0 : i32, i32
  }
  func.func @transform_7(%arg0: i32) -> (i32, i32) {
    %c0_i32 = arith.constant 0 : i32
    %c0_i32_0 = arith.constant 0 : i32
    return %arg0, %c0_i32 : i32, i32
  }
}

</mosaic_0001>

<llo_original>
// kernel: tpu_custom_call.1
$region0: #{tpu_custom_call.1}
  #allocation0 [shape = 'u32[]', space=smem, size = 0x4, offset = 0x4, fixed_abs, tag = 'smem constant byte address 0x4 - core index']
  #allocation1 [shape = 'u32[144,128]{1,0:T(1,128)}', space=vmem, size = 0x12000, scoped, tag = 'internal scratch']
  %s0 = inlined_call_operand.hbm [shape: bf16[8,128], index: 0, kind: input, shape index: {}]
  %s1 = inlined_call_operand.hbm [shape: bf16[128,128], index: 1, kind: input, shape index: {}]
  %s2 = inlined_call_operand.hbm [shape: bf16[128,128], index: 2, kind: input, shape index: {}]
  %s3 = inlined_call_operand.hbm [shape: bf16[128,128], index: 3, kind: input, shape index: {}]
  %s4 = inlined_call_operand.hbm [shape: bf16[128,128], index: 4, kind: input, shape index: {}]
  %s5 = inlined_call_operand.hbm [shape: bf16[128,128], index: 5, kind: input, shape index: {}]
  %s6 = inlined_call_operand.vmem [shape: f32[1,640], index: 6, kind: input, shape index: {}]
  %s7 = inlined_call_operand.hbm [shape: f32[8,128], index: 7, kind: output, shape index: {}]
  %s8 = sld [smem:[#allocation0]]
  $region62: #{tpu_custom_call.1} parent=0
    _
  %s10 = ssub.s32 1, %s8
  %s11 = scalar_select 0, %s10, %s8
  $region1: #{tpu_custom_call.1} parent=0
    #allocation2 [shape = 'u8[2048]{0}', space=vmem, size = 0x800, scoped, tag = 'input window, operand 0, single buffered']
    #allocation3 [shape = 's32[1]{0}', space=sflag, size = 0x4, scoped, tag = 'scoped memory for tpu_custom_call.1']
    #allocation4 [shape = 's32[1]{0}', space=sflag, size = 0x4, scoped, tag = 'scoped memory for tpu_custom_call.1']
    #allocation5 [shape = 'u8[32768]{0}', space=vmem, size = 0x8000, scoped, tag = 'input window, operand 1, single buffered']
    #allocation6 [shape = 's32[1]{0}', space=sflag, size = 0x4, scoped, tag = 'scoped memory for tpu_custom_call.1']
    #allocation7 [shape = 'u8[32768]{0}', space=vmem, size = 0x8000, scoped, tag = 'input window, operand 2, single buffered']
    #allocation8 [shape = 'u8[32768]{0}', space=vmem, size = 0x8000, scoped, tag = 'input window, operand 3, single buffered']
    #allocation9 [shape = 's32[1]{0}', space=sflag, size = 0x4, scoped, tag = 'scoped memory for tpu_custom_call.1']
    #allocation10 [shape = 'u8[32768]{0}', space=vmem, size = 0x8000, scoped, tag = 'input window, operand 4, single buffered']
    #allocation11 [shape = 'u8[32768]{0}', space=vmem, size = 0x8000, scoped, tag = 'input window, operand 5, single buffered']
    #allocation12 [shape = 's32[1]{0}', space=sflag, size = 0x4, scoped, tag = 'scoped memory for tpu_custom_call.1']
    #allocation13 [shape = 'u8[4096]{0}', space=vmem, size = 0x1000, scoped, tag = 'output window, operand 0, single buffered']
    %12 = vsyncpa [#allocation3], 0
    %13 = vsyncpa [#allocation6], 0
    %14 = vsyncpa [#allocation9], 0
    %15 = vsyncpa [#allocation12], 0
    %16 = vsyncpa [#allocation4], 0
    // Predicated region
    $region2: #{tpu_custom_call.1} parent=1 // pred_check
      _
    $region3: #{tpu_custom_call.1} parent=1 // pred_check_branch
      %18 = sbr.rel (0) target = $region5
    $region4: #{tpu_custom_call.1} parent=1 // pred_region
      %s20 = ssub.s32 64, 64
      %21 = vsyncadd [#allocation3], %s20
      %s23 = sshll.u32 [#allocation2], 4
      %s24 = int_to_ptr.vmem [resolvable:$true] %s23
      %26 = dma.hbm_to_vmem [thread:$0]  %s0, 64, %s24, [#allocation3]
    $region5: #{tpu_custom_call.1} parent=1 // pred_fallthru
      _
    // Predicated region
    $region6: #{tpu_custom_call.1} parent=1 // pred_check
      _
    $region7: #{tpu_custom_call.1} parent=1 // pred_check_branch
      %28 = sbr.rel (0) target = $region9
    $region8: #{tpu_custom_call.1} parent=1 // pred_region
      %s30 = ssub.s32 1024, 1024
      %31 = vsyncadd [#allocation6], %s30
      %s32 = sshll.u32 [#allocation5], 4
      %s33 = int_to_ptr.vmem [resolvable:$true] %s32
      %38 = dma.hbm_to_vmem [thread:$0]  %s1, 1024, %s33, [#allocation6], 64, 64, 4
    $region9: #{tpu_custom_call.1} parent=1 // pred_fallthru
      _
    // Predicated region
    $region10: #{tpu_custom_call.1} parent=1 // pred_check
      _
    $region11: #{tpu_custom_call.1} parent=1 // pred_check_branch
      %40 = sbr.rel (0) target = $region13
    $region12: #{tpu_custom_call.1} parent=1 // pred_region
      %s42 = ssub.s32 1024, 1024
      %43 = vsyncadd [#allocation6], %s42
      %s44 = sshll.u32 [#allocation7], 4
      %s45 = int_to_ptr.vmem [resolvable:$true] %s44
      %50 = dma.hbm_to_vmem [thread:$0]  %s2, 1024, %s45, [#allocation6], 64, 64, 4
    $region13: #{tpu_custom_call.1} parent=1 // pred_fallthru
      _
    // Predicated region
    $region14: #{tpu_custom_call.1} parent=1 // pred_check
      _
    $region15: #{tpu_custom_call.1} parent=1 // pred_check_branch
      %52 = sbr.rel (0) target = $region17
    $region16: #{tpu_custom_call.1} parent=1 // pred_region
      %s54 = ssub.s32 1024, 1024
      %55 = vsyncadd [#allocation9], %s54
      %s56 = sshll.u32 [#allocation8], 4
      %s57 = int_to_ptr.vmem [resolvable:$true] %s56
      %62 = dma.hbm_to_vmem [thread:$0]  %s3, 1024, %s57, [#allocation9], 64, 64, 4
    $region17: #{tpu_custom_call.1} parent=1 // pred_fallthru
      _
    // Predicated region
    $region18: #{tpu_custom_call.1} parent=1 // pred_check
      _
    $region19: #{tpu_custom_call.1} parent=1 // pred_check_branch
      %64 = sbr.rel (0) target = $region21
    $region20: #{tpu_custom_call.1} parent=1 // pred_region
      %s66 = ssub.s32 1024, 1024
      %67 = vsyncadd [#allocation9], %s66
      %s68 = sshll.u32 [#allocation10], 4
      %s69 = int_to_ptr.vmem [resolvable:$true] %s68
      %74 = dma.hbm_to_vmem [thread:$0]  %s4, 1024, %s69, [#allocation9], 64, 64, 4
    $region21: #{tpu_custom_call.1} parent=1 // pred_fallthru
      _
    // Predicated region
    $region22: #{tpu_custom_call.1} parent=1 // pred_check
      _
    $region23: #{tpu_custom_call.1} parent=1 // pred_check_branch
      %76 = sbr.rel (0) target = $region25
    $region24: #{tpu_custom_call.1} parent=1 // pred_region
      %s78 = ssub.s32 1024, 1024
      %79 = vsyncadd [#allocation12], %s78
      %s80 = sshll.u32 [#allocation11], 4
      %s81 = int_to_ptr.vmem [resolvable:$true] %s80
      %86 = dma.hbm_to_vmem [thread:$0]  %s5, 1024, %s81, [#allocation12], 64, 64, 4
    $region25: #{tpu_custom_call.1} parent=1 // pred_fallthru
      _
    // Predicated region
    $region26: #{tpu_custom_call.1} parent=1 // pred_check
      _
    $region27: #{tpu_custom_call.1} parent=1 // pred_check_branch
      %88 = sbr.rel (0) target = $region29
    $region28: #{tpu_custom_call.1} parent=1 // pred_region
      _
    $region29: #{tpu_custom_call.1} parent=1 // pred_fallthru
      _
    // Predicated region
    $region30: #{tpu_custom_call.1} parent=1 // pred_check
      _
    $region31: #{tpu_custom_call.1} parent=1 // pred_check_branch
      %90 = sbr.rel (0) target = $region33
    $region32: #{tpu_custom_call.1} parent=1 // pred_region
      %91 = dma.done [#allocation3], 64
    $region33: #{tpu_custom_call.1} parent=1 // pred_fallthru
      _
    // Predicated region
    $region34: #{tpu_custom_call.1} parent=1 // pred_check
      _
    $region35: #{tpu_custom_call.1} parent=1 // pred_check_branch
      %93 = sbr.rel (0) target = $region37
    $region36: #{tpu_custom_call.1} parent=1 // pred_region
      %94 = dma.done [#allocation6], 1024
    $region37: #{tpu_custom_call.1} parent=1 // pred_fallthru
      _
    // Predicated region
    $region38: #{tpu_custom_call.1} parent=1 // pred_check
      _
    $region39: #{tpu_custom_call.1} parent=1 // pred_check_branch
      %96 = sbr.rel (0) target = $region41
    $region40: #{tpu_custom_call.1} parent=1 // pred_region
      %97 = dma.done [#allocation6], 1024
    $region41: #{tpu_custom_call.1} parent=1 // pred_fallthru
      _
    // Predicated region
    $region42: #{tpu_custom_call.1} parent=1 // pred_check
      _
    $region43: #{tpu_custom_call.1} parent=1 // pred_check_branch
      %99 = sbr.rel (0) target = $region45
    $region44: #{tpu_custom_call.1} parent=1 // pred_region
      %100 = dma.done [#allocation9], 1024
    $region45: #{tpu_custom_call.1} parent=1 // pred_fallthru
      _
    // Predicated region
    $region46: #{tpu_custom_call.1} parent=1 // pred_check
      _
    $region47: #{tpu_custom_call.1} parent=1 // pred_check_branch
      %102 = sbr.rel (0) target = $region49
    $region48: #{tpu_custom_call.1} parent=1 // pred_region
      %103 = dma.done [#allocation9], 1024
    $region49: #{tpu_custom_call.1} parent=1 // pred_fallthru
      _
    // Predicated region
    $region50: #{tpu_custom_call.1} parent=1 // pred_check
      _
    $region51: #{tpu_custom_call.1} parent=1 // pred_check_branch
      %105 = sbr.rel (0) target = $region53
    $region52: #{tpu_custom_call.1} parent=1 // pred_region
      %106 = dma.done [#allocation12], 1024
    $region53: #{tpu_custom_call.1} parent=1 // pred_fallthru
      _
    %v108 = vld [vmem:[#allocation2] sm:$0xf]
    %v109 = vld [vmem:[#allocation5] sm:$0xf]
    %v110 = vld [vmem:[#allocation5 + $0x4] sm:$0xf]
    %v111 = vld [vmem:[#allocation5 + $0x8] sm:$0xf]
    %v112 = vld [vmem:[#allocation5 + $0xc] sm:$0xf]
    %v113 = vld [vmem:[#allocation5 + $0x10] sm:$0xf]
    %v114 = vld [vmem:[#allocation5 + $0x14] sm:$0xf]
    %v115 = vld [vmem:[#allocation5 + $0x18] sm:$0xf]
    %v116 = vld [vmem:[#allocation5 + $0x1c] sm:$0xf]
    %v117 = vld [vmem:[#allocation5 + $0x20] sm:$0xf]
    %v118 = vld [vmem:[#allocation5 + $0x24] sm:$0xf]
    %v119 = vld [vmem:[#allocation5 + $0x28] sm:$0xf]
    %v120 = vld [vmem:[#allocation5 + $0x2c] sm:$0xf]
    %v121 = vld [vmem:[#allocation5 + $0x30] sm:$0xf]
    %v122 = vld [vmem:[#allocation5 + $0x34] sm:$0xf]
    %v123 = vld [vmem:[#allocation5 + $0x38] sm:$0xf]
    %v124 = vld [vmem:[#allocation5 + $0x3c] sm:$0xf]
    %v125 = vld [vmem:[%s6] sm:$0x1]
    %v127 = vlaneseq
    %v128 = vshrl.u32 %v127, 7
    %v129 = vsub.s32 0, %v128
    %v130 = vrot.slane %v125, %v129
    %v148 = vunpack.c.l.b16 %v109
    %v149 = vunpack.c.l.b16 %v110
    %v150 = vunpack.c.l.b16 %v111
    %v151 = vunpack.c.l.b16 %v112
    %v152 = vunpack.c.l.b16 %v113
    %v153 = vunpack.c.l.b16 %v114
    %v154 = vunpack.c.l.b16 %v115
    %v155 = vunpack.c.l.b16 %v116
    %v156 = vunpack.c.l.b16 %v117
    %v157 = vunpack.c.l.b16 %v118
    %v158 = vunpack.c.l.b16 %v119
    %v159 = vunpack.c.l.b16 %v120
    %v160 = vunpack.c.l.b16 %v121
    %v161 = vunpack.c.l.b16 %v122
    %v162 = vunpack.c.l.b16 %v123
    %v163 = vunpack.c.l.b16 %v124
    %v164 = vpack.c.b16 %v149, %v148
    %v165 = vpack.c.b16 %v151, %v150
    %v166 = vpack.c.b16 %v153, %v152
    %v167 = vpack.c.b16 %v155, %v154
    %v168 = vpack.c.b16 %v157, %v156
    %v169 = vpack.c.b16 %v159, %v158
    %v170 = vpack.c.b16 %v161, %v160
    %v171 = vpack.c.b16 %v163, %v162
    %180 = vmatprep.subr.bf16.mxu0 0
    %181 = vmatpush1.bf16.msra.mxu0 %v164
    %182 = vmatprep.subr.bf16.mxu0 0
    %183 = vmatpush1.bf16.msra.mxu0 %v165
    %184 = vmatprep.subr.bf16.mxu0 0
    %185 = vmatpush1.bf16.msra.mxu0 %v166
    %186 = vmatprep.subr.bf16.mxu0 0
    %187 = vmatpush1.bf16.msra.mxu0 %v167
    %188 = vmatprep.subr.bf16.mxu0 0
    %189 = vmatpush1.bf16.msra.mxu0 %v168
    %190 = vmatprep.subr.bf16.mxu0 0
    %191 = vmatpush1.bf16.msra.mxu0 %v169
    %192 = vmatprep.subr.bf16.mxu0 0
    %193 = vmatpush1.bf16.msra.mxu0 %v170
    %194 = vmatprep.subr.bf16.mxu0 0
    %195 = vmatpush1.bf16.msra.mxu0 %v171
    %196 = vmatprep.subr.bf16.mxu0 0
    %197 = vmatpush1.bf16.msra.mxu0 0
    %198 = vmatprep.subr.bf16.mxu0 0
    %199 = vmatpush1.bf16.msra.mxu0 0
    %200 = vmatprep.subr.bf16.mxu0 0
    %201 = vmatpush1.bf16.msra.mxu0 0
    %202 = vmatprep.subr.bf16.mxu0 0
    %203 = vmatpush1.bf16.msra.mxu0 0
    %204 = vmatprep.subr.bf16.mxu0 0
    %205 = vmatpush1.bf16.msra.mxu0 0
    %206 = vmatprep.subr.bf16.mxu0 0
    %207 = vmatpush1.bf16.msra.mxu0 0
    %208 = vmatprep.subr.bf16.mxu0 0
    %209 = vmatpush1.bf16.msra.mxu0 0
    %210 = vmatprep.subr.bf16.mxu0 0
    %211 = vmatpush1.bf16.msra.mxu0 0
    %212 = vmatprep.mubr.bf16.mxu0 0
    %213 = vmatmul.mubr.bf16.gmra.mrb[0].mxu0 %v108
    %v214 = vpop.f32.mrb[0].mxu0
    %v215 = vadd.f32 %v130, %v214
    %v216 = vpop.f32.mrb[0].mxu0
    %v217 = vpop.f32.mrb[0].mxu0
    %v218 = vpop.f32.mrb[0].mxu0
    %219 = vdwg.mxu0
    %v220 = vmax.f32 %v215, 0.0
    %v221 = vpack.c.bf16 %v220, %v220
    %v222 = vld [vmem:[#allocation7] sm:$0xf]
    %v223 = vld [vmem:[#allocation7 + $0x4] sm:$0xf]
    %v224 = vld [vmem:[#allocation7 + $0x8] sm:$0xf]
    %v225 = vld [vmem:[#allocation7 + $0xc] sm:$0xf]
    %v226 = vld [vmem:[#allocation7 + $0x10] sm:$0xf]
    %v227 = vld [vmem:[#allocation7 + $0x14] sm:$0xf]
    %v228 = vld [vmem:[#allocation7 + $0x18] sm:$0xf]
    %v229 = vld [vmem:[#allocation7 + $0x1c] sm:$0xf]
    %v230 = vld [vmem:[#allocation7 + $0x20] sm:$0xf]
    %v231 = vld [vmem:[#allocation7 + $0x24] sm:$0xf]
    %v232 = vld [vmem:[#allocation7 + $0x28] sm:$0xf]
    %v233 = vld [vmem:[#allocation7 + $0x2c] sm:$0xf]
    %v234 = vld [vmem:[#allocation7 + $0x30] sm:$0xf]
    %v235 = vld [vmem:[#allocation7 + $0x34] sm:$0xf]
    %v236 = vld [vmem:[#allocation7 + $0x38] sm:$0xf]
    %v237 = vld [vmem:[#allocation7 + $0x3c] sm:$0xf]
    %v238 = vld [vmem:[%s6 + $0x1] sm:$0x1]
    %v240 = vlaneseq
    %v241 = vshrl.u32 %v240, 7
    %v242 = vsub.s32 0, %v241
    %v243 = vrot.slane %v238, %v242
    %v261 = vunpack.c.l.b16 %v222
    %v262 = vunpack.c.l.b16 %v223
    %v263 = vunpack.c.l.b16 %v224
    %v264 = vunpack.c.l.b16 %v225
    %v265 = vunpack.c.l.b16 %v226
    %v266 = vunpack.c.l.b16 %v227
    %v267 = vunpack.c.l.b16 %v228
    %v268 = vunpack.c.l.b16 %v229
    %v269 = vunpack.c.l.b16 %v230
    %v270 = vunpack.c.l.b16 %v231
    %v271 = vunpack.c.l.b16 %v232
    %v272 = vunpack.c.l.b16 %v233
    %v273 = vunpack.c.l.b16 %v234
    %v274 = vunpack.c.l.b16 %v235
    %v275 = vunpack.c.l.b16 %v236
    %v276 = vunpack.c.l.b16 %v237
    %v277 = vpack.c.b16 %v262, %v261
    %v278 = vpack.c.b16 %v264, %v263
    %v279 = vpack.c.b16 %v266, %v265
    %v280 = vpack.c.b16 %v268, %v267
    %v281 = vpack.c.b16 %v270, %v269
    %v282 = vpack.c.b16 %v272, %v271
    %v283 = vpack.c.b16 %v274, %v273
    %v284 = vpack.c.b16 %v276, %v275
    %293 = vmatprep.subr.bf16.mxu0 0
    %294 = vmatpush1.bf16.msra.mxu0 %v277
    %295 = vmatprep.subr.bf16.mxu0 0
    %296 = vmatpush1.bf16.msra.mxu0 %v278
    %297 = vmatprep.subr.bf16.mxu0 0
    %298 = vmatpush1.bf16.msra.mxu0 %v279
    %299 = vmatprep.subr.bf16.mxu0 0
    %300 = vmatpush1.bf16.msra.mxu0 %v280
    %301 = vmatprep.subr.bf16.mxu0 0
    %302 = vmatpush1.bf16.msra.mxu0 %v281
    %303 = vmatprep.subr.bf16.mxu0 0
    %304 = vmatpush1.bf16.msra.mxu0 %v282
    %305 = vmatprep.subr.bf16.mxu0 0
    %306 = vmatpush1.bf16.msra.mxu0 %v283
    %307 = vmatprep.subr.bf16.mxu0 0
    %308 = vmatpush1.bf16.msra.mxu0 %v284
    %309 = vmatprep.subr.bf16.mxu0 0
    %310 = vmatpush1.bf16.msra.mxu0 0
    %311 = vmatprep.subr.bf16.mxu0 0
    %312 = vmatpush1.bf16.msra.mxu0 0
    %313 = vmatprep.subr.bf16.mxu0 0
    %314 = vmatpush1.bf16.msra.mxu0 0
    %315 = vmatprep.subr.bf16.mxu0 0
    %316 = vmatpush1.bf16.msra.mxu0 0
    %317 = vmatprep.subr.bf16.mxu0 0
    %318 = vmatpush1.bf16.msra.mxu0 0
    %319 = vmatprep.subr.bf16.mxu0 0
    %320 = vmatpush1.bf16.msra.mxu0 0
    %321 = vmatprep.subr.bf16.mxu0 0
    %322 = vmatpush1.bf16.msra.mxu0 0
    %323 = vmatprep.subr.bf16.mxu0 0
    %324 = vmatpush1.bf16.msra.mxu0 0
    %325 = vmatprep.mubr.bf16.mxu0 0
    %326 = vmatmul.mubr.bf16.gmra.mrb[0].mxu0 %v221
    %v327 = vpop.f32.mrb[0].mxu0
    %v328 = vadd.f32 %v243, %v327
    %v329 = vpop.f32.mrb[0].mxu0
    %v330 = vpop.f32.mrb[0].mxu0
    %v331 = vpop.f32.mrb[0].mxu0
    %332 = vdwg.mxu0
    %v333 = vmax.f32 %v328, 0.0
    %v334 = vpack.c.bf16 %v333, %v333
    %v335 = vld [vmem:[#allocation8] sm:$0xf]
    %v336 = vld [vmem:[#allocation8 + $0x4] sm:$0xf]
    %v337 = vld [vmem:[#allocation8 + $0x8] sm:$0xf]
    %v338 = vld [vmem:[#allocation8 + $0xc] sm:$0xf]
    %v339 = vld [vmem:[#allocation8 + $0x10] sm:$0xf]
    %v340 = vld [vmem:[#allocation8 + $0x14] sm:$0xf]
    %v341 = vld [vmem:[#allocation8 + $0x18] sm:$0xf]
    %v342 = vld [vmem:[#allocation8 + $0x1c] sm:$0xf]
    %v343 = vld [vmem:[#allocation8 + $0x20] sm:$0xf]
    %v344 = vld [vmem:[#allocation8 + $0x24] sm:$0xf]
    %v345 = vld [vmem:[#allocation8 + $0x28] sm:$0xf]
    %v346 = vld [vmem:[#allocation8 + $0x2c] sm:$0xf]
    %v347 = vld [vmem:[#allocation8 + $0x30] sm:$0xf]
    %v348 = vld [vmem:[#allocation8 + $0x34] sm:$0xf]
    %v349 = vld [vmem:[#allocation8 + $0x38] sm:$0xf]
    %v350 = vld [vmem:[#allocation8 + $0x3c] sm:$0xf]
    %v351 = vld [vmem:[%s6 + $0x2] sm:$0x1]
    %v353 = vlaneseq
    %v354 = vshrl.u32 %v353, 7
    %v355 = vsub.s32 0, %v354
    %v356 = vrot.slane %v351, %v355
    %v374 = vunpack.c.l.b16 %v335
    %v375 = vunpack.c.l.b16 %v336
    %v376 = vunpack.c.l.b16 %v337
    %v377 = vunpack.c.l.b16 %v338
    %v378 = vunpack.c.l.b16 %v339
    %v379 = vunpack.c.l.b16 %v340
    %v380 = vunpack.c.l.b16 %v341
    %v381 = vunpack.c.l.b16 %v342
    %v382 = vunpack.c.l.b16 %v343
    %v383 = vunpack.c.l.b16 %v344
    %v384 = vunpack.c.l.b16 %v345
    %v385 = vunpack.c.l.b16 %v346
    %v386 = vunpack.c.l.b16 %v347
    %v387 = vunpack.c.l.b16 %v348
    %v388 = vunpack.c.l.b16 %v349
    %v389 = vunpack.c.l.b16 %v350
    %v390 = vpack.c.b16 %v375, %v374
    %v391 = vpack.c.b16 %v377, %v376
    %v392 = vpack.c.b16 %v379, %v378
    %v393 = vpack.c.b16 %v381, %v380
    %v394 = vpack.c.b16 %v383, %v382
    %v395 = vpack.c.b16 %v385, %v384
    %v396 = vpack.c.b16 %v387, %v386
    %v397 = vpack.c.b16 %v389, %v388
    %406 = vmatprep.subr.bf16.mxu0 0
    %407 = vmatpush1.bf16.msra.mxu0 %v390
    %408 = vmatprep.subr.bf16.mxu0 0
    %409 = vmatpush1.bf16.msra.mxu0 %v391
    %410 = vmatprep.subr.bf16.mxu0 0
    %411 = vmatpush1.bf16.msra.mxu0 %v392
    %412 = vmatprep.subr.bf16.mxu0 0
    %413 = vmatpush1.bf16.msra.mxu0 %v393
    %414 = vmatprep.subr.bf16.mxu0 0
    %415 = vmatpush1.bf16.msra.mxu0 %v394
    %416 = vmatprep.subr.bf16.mxu0 0
    %417 = vmatpush1.bf16.msra.mxu0 %v395
    %418 = vmatprep.subr.bf16.mxu0 0
    %419 = vmatpush1.bf16.msra.mxu0 %v396
    %420 = vmatprep.subr.bf16.mxu0 0
    %421 = vmatpush1.bf16.msra.mxu0 %v397
    %422 = vmatprep.subr.bf16.mxu0 0
    %423 = vmatpush1.bf16.msra.mxu0 0
    %424 = vmatprep.subr.bf16.mxu0 0
    %425 = vmatpush1.bf16.msra.mxu0 0
    %426 = vmatprep.subr.bf16.mxu0 0
    %427 = vmatpush1.bf16.msra.mxu0 0
    %428 = vmatprep.subr.bf16.mxu0 0
    %429 = vmatpush1.bf16.msra.mxu0 0
    %430 = vmatprep.subr.bf16.mxu0 0
    %431 = vmatpush1.bf16.msra.mxu0 0
    %432 = vmatprep.subr.bf16.mxu0 0
    %433 = vmatpush1.bf16.msra.mxu0 0
    %434 = vmatprep.subr.bf16.mxu0 0
    %435 = vmatpush1.bf16.msra.mxu0 0
    %436 = vmatprep.subr.bf16.mxu0 0
    %437 = vmatpush1.bf16.msra.mxu0 0
    %438 = vmatprep.mubr.bf16.mxu0 0
    %439 = vmatmul.mubr.bf16.gmra.mrb[0].mxu0 %v334
    %v440 = vpop.f32.mrb[0].mxu0
    %v441 = vadd.f32 %v356, %v440
    %v442 = vpop.f32.mrb[0].mxu0
    %v443 = vpop.f32.mrb[0].mxu0
    %v444 = vpop.f32.mrb[0].mxu0
    %445 = vdwg.mxu0
    %v446 = vmax.f32 %v441, 0.0
    %v447 = vpack.c.bf16 %v446, %v446
    %v448 = vld [vmem:[#allocation10] sm:$0xf]
    %v449 = vld [vmem:[#allocation10 + $0x4] sm:$0xf]
    %v450 = vld [vmem:[#allocation10 + $0x8] sm:$0xf]
    %v451 = vld [vmem:[#allocation10 + $0xc] sm:$0xf]
    %v452 = vld [vmem:[#allocation10 + $0x10] sm:$0xf]
    %v453 = vld [vmem:[#allocation10 + $0x14] sm:$0xf]
    %v454 = vld [vmem:[#allocation10 + $0x18] sm:$0xf]
    %v455 = vld [vmem:[#allocation10 + $0x1c] sm:$0xf]
    %v456 = vld [vmem:[#allocation10 + $0x20] sm:$0xf]
    %v457 = vld [vmem:[#allocation10 + $0x24] sm:$0xf]
    %v458 = vld [vmem:[#allocation10 + $0x28] sm:$0xf]
    %v459 = vld [vmem:[#allocation10 + $0x2c] sm:$0xf]
    %v460 = vld [vmem:[#allocation10 + $0x30] sm:$0xf]
    %v461 = vld [vmem:[#allocation10 + $0x34] sm:$0xf]
    %v462 = vld [vmem:[#allocation10 + $0x38] sm:$0xf]
    %v463 = vld [vmem:[#allocation10 + $0x3c] sm:$0xf]
    %v464 = vld [vmem:[%s6 + $0x3] sm:$0x1]
    %v466 = vlaneseq
    %v467 = vshrl.u32 %v466, 7
    %v468 = vsub.s32 0, %v467
    %v469 = vrot.slane %v464, %v468
    %v487 = vunpack.c.l.b16 %v448
    %v488 = vunpack.c.l.b16 %v449
    %v489 = vunpack.c.l.b16 %v450
    %v490 = vunpack.c.l.b16 %v451
    %v491 = vunpack.c.l.b16 %v452
    %v492 = vunpack.c.l.b16 %v453
    %v493 = vunpack.c.l.b16 %v454
    %v494 = vunpack.c.l.b16 %v455
    %v495 = vunpack.c.l.b16 %v456
    %v496 = vunpack.c.l.b16 %v457
    %v497 = vunpack.c.l.b16 %v458
    %v498 = vunpack.c.l.b16 %v459
    %v499 = vunpack.c.l.b16 %v460
    %v500 = vunpack.c.l.b16 %v461
    %v501 = vunpack.c.l.b16 %v462
    %v502 = vunpack.c.l.b16 %v463
    %v503 = vpack.c.b16 %v488, %v487
    %v504 = vpack.c.b16 %v490, %v489
    %v505 = vpack.c.b16 %v492, %v491
    %v506 = vpack.c.b16 %v494, %v493
    %v507 = vpack.c.b16 %v496, %v495
    %v508 = vpack.c.b16 %v498, %v497
    %v509 = vpack.c.b16 %v500, %v499
    %v510 = vpack.c.b16 %v502, %v501
    %519 = vmatprep.subr.bf16.mxu0 0
    %520 = vmatpush1.bf16.msra.mxu0 %v503
    %521 = vmatprep.subr.bf16.mxu0 0
    %522 = vmatpush1.bf16.msra.mxu0 %v504
    %523 = vmatprep.subr.bf16.mxu0 0
    %524 = vmatpush1.bf16.msra.mxu0 %v505
    %525 = vmatprep.subr.bf16.mxu0 0
    %526 = vmatpush1.bf16.msra.mxu0 %v506
    %527 = vmatprep.subr.bf16.mxu0 0
    %528 = vmatpush1.bf16.msra.mxu0 %v507
    %529 = vmatprep.subr.bf16.mxu0 0
    %530 = vmatpush1.bf16.msra.mxu0 %v508
    %531 = vmatprep.subr.bf16.mxu0 0
    %532 = vmatpush1.bf16.msra.mxu0 %v509
    %533 = vmatprep.subr.bf16.mxu0 0
    %534 = vmatpush1.bf16.msra.mxu0 %v510
    %535 = vmatprep.subr.bf16.mxu0 0
    %536 = vmatpush1.bf16.msra.mxu0 0
    %537 = vmatprep.subr.bf16.mxu0 0
    %538 = vmatpush1.bf16.msra.mxu0 0
    %539 = vmatprep.subr.bf16.mxu0 0
    %540 = vmatpush1.bf16.msra.mxu0 0
    %541 = vmatprep.subr.bf16.mxu0 0
    %542 = vmatpush1.bf16.msra.mxu0 0
    %543 = vmatprep.subr.bf16.mxu0 0
    %544 = vmatpush1.bf16.msra.mxu0 0
    %545 = vmatprep.subr.bf16.mxu0 0
    %546 = vmatpush1.bf16.msra.mxu0 0
    %547 = vmatprep.subr.bf16.mxu0 0
    %548 = vmatpush1.bf16.msra.mxu0 0
    %549 = vmatprep.subr.bf16.mxu0 0
    %550 = vmatpush1.bf16.msra.mxu0 0
    %551 = vmatprep.mubr.bf16.mxu0 0
    %552 = vmatmul.mubr.bf16.gmra.mrb[0].mxu0 %v447
    %v553 = vpop.f32.mrb[0].mxu0
    %v554 = vadd.f32 %v469, %v553
    %v555 = vpop.f32.mrb[0].mxu0
    %v556 = vpop.f32.mrb[0].mxu0
    %v557 = vpop.f32.mrb[0].mxu0
    %558 = vdwg.mxu0
    %v559 = vmax.f32 %v554, 0.0
    %v560 = vpack.c.bf16 %v559, %v559
    %v561 = vld [vmem:[#allocation11] sm:$0xf]
    %v562 = vld [vmem:[#allocation11 + $0x4] sm:$0xf]
    %v563 = vld [vmem:[#allocation11 + $0x8] sm:$0xf]
    %v564 = vld [vmem:[#allocation11 + $0xc] sm:$0xf]
    %v565 = vld [vmem:[#allocation11 + $0x10] sm:$0xf]
    %v566 = vld [vmem:[#allocation11 + $0x14] sm:$0xf]
    %v567 = vld [vmem:[#allocation11 + $0x18] sm:$0xf]
    %v568 = vld [vmem:[#allocation11 + $0x1c] sm:$0xf]
    %v569 = vld [vmem:[#allocation11 + $0x20] sm:$0xf]
    %v570 = vld [vmem:[#allocation11 + $0x24] sm:$0xf]
    %v571 = vld [vmem:[#allocation11 + $0x28] sm:$0xf]
    %v572 = vld [vmem:[#allocation11 + $0x2c] sm:$0xf]
    %v573 = vld [vmem:[#allocation11 + $0x30] sm:$0xf]
    %v574 = vld [vmem:[#allocation11 + $0x34] sm:$0xf]
    %v575 = vld [vmem:[#allocation11 + $0x38] sm:$0xf]
    %v576 = vld [vmem:[#allocation11 + $0x3c] sm:$0xf]
    %v577 = vld [vmem:[%s6 + $0x4] sm:$0x1]
    %v579 = vlaneseq
    %v580 = vshrl.u32 %v579, 7
    %v581 = vsub.s32 0, %v580
    %v582 = vrot.slane %v577, %v581
    %v600 = vunpack.c.l.b16 %v561
    %v601 = vunpack.c.l.b16 %v562
    %v602 = vunpack.c.l.b16 %v563
    %v603 = vunpack.c.l.b16 %v564
    %v604 = vunpack.c.l.b16 %v565
    %v605 = vunpack.c.l.b16 %v566
    %v606 = vunpack.c.l.b16 %v567
    %v607 = vunpack.c.l.b16 %v568
    %v608 = vunpack.c.l.b16 %v569
    %v609 = vunpack.c.l.b16 %v570
    %v610 = vunpack.c.l.b16 %v571
    %v611 = vunpack.c.l.b16 %v572
    %v612 = vunpack.c.l.b16 %v573
    %v613 = vunpack.c.l.b16 %v574
    %v614 = vunpack.c.l.b16 %v575
    %v615 = vunpack.c.l.b16 %v576
    %v616 = vpack.c.b16 %v601, %v600
    %v617 = vpack.c.b16 %v603, %v602
    %v618 = vpack.c.b16 %v605, %v604
    %v619 = vpack.c.b16 %v607, %v606
    %v620 = vpack.c.b16 %v609, %v608
    %v621 = vpack.c.b16 %v611, %v610
    %v622 = vpack.c.b16 %v613, %v612
    %v623 = vpack.c.b16 %v615, %v614
    %632 = vmatprep.subr.bf16.mxu0 0
    %633 = vmatpush1.bf16.msra.mxu0 %v616
    %634 = vmatprep.subr.bf16.mxu0 0
    %635 = vmatpush1.bf16.msra.mxu0 %v617
    %636 = vmatprep.subr.bf16.mxu0 0
    %637 = vmatpush1.bf16.msra.mxu0 %v618
    %638 = vmatprep.subr.bf16.mxu0 0
    %639 = vmatpush1.bf16.msra.mxu0 %v619
    %640 = vmatprep.subr.bf16.mxu0 0
    %641 = vmatpush1.bf16.msra.mxu0 %v620
    %642 = vmatprep.subr.bf16.mxu0 0
    %643 = vmatpush1.bf16.msra.mxu0 %v621
    %644 = vmatprep.subr.bf16.mxu0 0
    %645 = vmatpush1.bf16.msra.mxu0 %v622
    %646 = vmatprep.subr.bf16.mxu0 0
    %647 = vmatpush1.bf16.msra.mxu0 %v623
    %648 = vmatprep.subr.bf16.mxu0 0
    %649 = vmatpush1.bf16.msra.mxu0 0
    %650 = vmatprep.subr.bf16.mxu0 0
    %651 = vmatpush1.bf16.msra.mxu0 0
    %652 = vmatprep.subr.bf16.mxu0 0
    %653 = vmatpush1.bf16.msra.mxu0 0
    %654 = vmatprep.subr.bf16.mxu0 0
    %655 = vmatpush1.bf16.msra.mxu0 0
    %656 = vmatprep.subr.bf16.mxu0 0
    %657 = vmatpush1.bf16.msra.mxu0 0
    %658 = vmatprep.subr.bf16.mxu0 0
    %659 = vmatpush1.bf16.msra.mxu0 0
    %660 = vmatprep.subr.bf16.mxu0 0
    %661 = vmatpush1.bf16.msra.mxu0 0
    %662 = vmatprep.subr.bf16.mxu0 0
    %663 = vmatpush1.bf16.msra.mxu0 0
    %664 = vmatprep.mubr.bf16.mxu0 0
    %665 = vmatmul.mubr.bf16.gmra.mrb[0].mxu0 %v560
    %v666 = vpop.f32.mrb[0].mxu0
    %v667 = vadd.f32 %v582, %v666
    %v668 = vpop.f32.mrb[0].mxu0
    %v669 = vpop.f32.mrb[0].mxu0
    %v670 = vpop.f32.mrb[0].mxu0
    %671 = vdwg.mxu0
    %672 = vst [vmem:[#allocation13] sm:$0xff] %v667
    // Predicated region
    $region54: #{tpu_custom_call.1} parent=1 // pred_check
      _
    $region55: #{tpu_custom_call.1} parent=1 // pred_check_branch
      %674 = sbr.rel (0) target = $region57
    $region56: #{tpu_custom_call.1} parent=1 // pred_region
      %s676 = ssub.s32 128, 128
      %677 = vsyncadd [#allocation4], %s676
      %s679 = sshll.u32 [#allocation13], 4
      %s680 = int_to_ptr.vmem [resolvable:$true] %s679
      %682 = dma.vmem_to_hbm [thread:$0]  %s680, 128, %s7, [#allocation4]
    $region57: #{tpu_custom_call.1} parent=1 // pred_fallthru
      _
    // Predicated region
    $region58: #{tpu_custom_call.1} parent=1 // pred_check
      _
    $region59: #{tpu_custom_call.1} parent=1 // pred_check_branch
      %684 = sbr.rel (0) target = $region61
    $region60: #{tpu_custom_call.1} parent=1 // pred_region
      %685 = dma.done [#allocation4], 128
    $region61: #{tpu_custom_call.1} parent=1 // pred_fallthru
      _
    %686 = vsyncpa [#allocation3], 1
    %687 = vsyncpa [#allocation6], 1
    %688 = vsyncpa [#allocation9], 1
    %689 = vsyncpa [#allocation12], 1
    %690 = vsyncpa [#allocation4], 1

</llo_original>
